<compile_context>
chip_gen: v6e
topology: v6e:2x2x1
jax: 0.10.0
libtpu: 0.0.40
codegen_flags: <defaults>
</compile_context>

<pallas_src>
import jax
import jax.numpy as jnp
from jax.experimental import pallas as pl
from jax.experimental.pallas import tpu as pltpu


_LANE = 128
_TARGET_BLOCK_BYTES = 2 << 20  # ~2 MiB per pipeline buffer


def _compute_dtype(dtype):
    # f32 / bf16 / f16 compute natively; int8 / fp8 / ints upcast to f32
    # (in-dtype 1/6 would truncate to 0 for ints and mangle fp8 scales).
    if jnp.issubdtype(dtype, jnp.floating) and jnp.dtype(dtype).itemsize >= 2:
        return dtype
    return jnp.float32


def _h_sigmoid_kernel(x_ref, o_ref):
    x = x_ref[...]
    cdt = _compute_dtype(x.dtype)
    xf = x.astype(cdt)
    three = jnp.asarray(3, cdt)
    zero = jnp.asarray(0, cdt)
    six = jnp.asarray(6, cdt)
    inv_six = jnp.asarray(1.0 / 6.0, cdt)
    # relu6(x + 3) * (1/6) == clamp(x + 3, 0, 6) * (1/6)
    y = jnp.clip(xf + three, zero, six) * inv_six
    o_ref[...] = y.astype(o_ref.dtype)


def _sublane_multiple(dtype) -> int:
    # f32 -> 8, bf16/f16 -> 16, int8/fp8 -> 32 (packed sublanes).
    itemsize = jnp.dtype(dtype).itemsize
    return max(8, 32 // itemsize)


def _pick_cols(n: int) -> int:
    """Largest lane-dense width in {1024,512,256,128} dividing n (0 if none)."""
    for c in (1024, 512, 256, 128):
        if n % c == 0:
            return c
    return 0


def _h_sigmoid_2d(x2d):
    """Run the kernel on a (rows, cols) slab; cols is a multiple of 128."""
    rows, cols = x2d.shape
    dtype = x2d.dtype
    itemsize = jnp.dtype(dtype).itemsize
    sub = _sublane_multiple(dtype)

    # Dtype-scaled block rows targeting ~2 MiB per buffer.
    max_block_rows = max(sub, (_TARGET_BLOCK_BYTES // (cols * itemsize)) // sub * sub)

    if rows <= sub:
        # Block dim equal to the full array dim is explicitly legal.
        tm = rows
    else:
        # Ensure >= 2 blocks so v7x's "parallel" axis uses both TensorCores.
        half_rows = pl.cdiv(rows, 2 * sub) * sub
        tm = max(sub, min(max_block_rows, half_rows))

    grid = (pl.cdiv(rows, tm),)  # partial trailing block is masked by Pallas

    block_bytes = tm * cols * itemsize
    # in + out, double buffered, plus headroom; stays under v5e's 16 MiB default.
    vmem_limit = int(2 * 2 * block_bytes + (2 << 20))

    n = rows * cols
    cost = pl.CostEstimate(
        flops=4 * n, transcendentals=0, bytes_accessed=2 * n * itemsize)

    return pl.pallas_call(
        _h_sigmoid_kernel,
        out_shape=jax.ShapeDtypeStruct((rows, cols), dtype),
        grid=grid,
        in_specs=[pl.BlockSpec((tm, cols), lambda i: (i, 0))],
        out_specs=pl.BlockSpec((tm, cols), lambda i: (i, 0)),
        compiler_params=pltpu.CompilerParams(
            dimension_semantics=("parallel",),
            vmem_limit_bytes=vmem_limit),
        cost_estimate=cost,
    )(x2d)


def _h_sigmoid_jnp(x):
    """Plain-JAX path for tiny / ragged tails (same math as the kernel)."""
    cdt = _compute_dtype(x.dtype)
    xf = x.astype(cdt)
    return (jnp.clip(xf + jnp.asarray(3, cdt), 0, jnp.asarray(6, cdt))
            * jnp.asarray(1.0 / 6.0, cdt)).astype(x.dtype)


def h_sigmoid(x):
    """Elementwise hard-sigmoid: ReLU6(x + 3) / 6, matching the PyTorch module."""
    orig_shape = x.shape
    n = int(x.size)
    if n == 0:
        return x

    cols = _pick_cols(n)
    if cols:
        # Common case: size is a multiple of 128 -> free reshape, no pad/slice.
        out2d = _h_sigmoid_2d(x.reshape(n // cols, cols))
        return out2d.reshape(orig_shape)

    # Rare ragged case: stream the 128-aligned bulk through the kernel and do
    # the < 128-element tail in plain jnp (one concat instead of pad + slice).
    flat = x.reshape(-1)
    bulk = (n // _LANE) * _LANE
    if bulk == 0:
        return _h_sigmoid_jnp(flat).reshape(orig_shape)
    bulk_cols = _pick_cols(bulk)
    head = _h_sigmoid_2d(flat[:bulk].reshape(bulk // bulk_cols, bulk_cols))
    tail = _h_sigmoid_jnp(flat[bulk:])
    return jnp.concatenate([head.reshape(-1), tail]).reshape(orig_shape)


if __name__ == "__main__":
    key = jax.random.PRNGKey(0)

    def ref_fn(v):
        return (jnp.clip(v.astype(jnp.float32) + 3.0, 0.0, 6.0) / 6.0).astype(v.dtype)

    # 1) NCHW activation consistent with the module's usage (single-block path).
    k0, k1, k2 = jax.random.split(key, 3)
    x0 = jax.random.normal(k0, (2, 4, 16, 16), dtype=jnp.float32) * 4.0
    y0 = jax.block_until_ready(h_sigmoid(x0))
    assert y0.shape == x0.shape and y0.dtype == x0.dtype
    assert jnp.allclose(y0, ref_fn(x0), atol=1e-6, rtol=1e-6)

    # 2) Shape exercising a partial (masked) trailing block and multi-block grid.
    x1 = jax.random.normal(k1, (2, 3, 40, 128), dtype=jnp.float32) * 4.0
    y1 = jax.block_until_ready(h_sigmoid(x1))
    assert jnp.allclose(y1, ref_fn(x1), atol=1e-6, rtol=1e-6)

    # 3) Ragged size (< 128 tail) exercising the jnp fallback path.
    x2 = jax.random.normal(k2, (3, 5, 7), dtype=jnp.float32) * 4.0
    y2 = jax.block_until_ready(h_sigmoid(x2))
    assert jnp.allclose(y2, ref_fn(x2), atol=1e-6, rtol=1e-6)

    print("KERNEL_OK")
</pallas_src>

<mosaic_0001>
module attributes {stable_mosaic.version = 11 : i64} {
  func.func @_h_sigmoid_kernel(%arg0: i32, %arg1: memref<2x1024xf32, #tpu.memory_space<vmem>>, %arg2: memref<2x1024xf32, #tpu.memory_space<vmem>>) attributes {dimension_semantics = [#tpu.dimension_semantics<parallel>], iteration_bounds = array<i64: 1>, scalar_prefetch = 0 : i64, scratch_operands = 0 : i64, tpu.core_type = #tpu.core_type<tc>, window_params = [{transform_indices = @transform_0, window_bounds = array<i64: 2, 1024>}, {transform_indices = @transform_1, window_bounds = array<i64: 2, 1024>}]} {
    %c0 = arith.constant 0 : index
    %c0_0 = arith.constant 0 : index
    %0 = vector.load %arg1[%c0, %c0_0] : memref<2x1024xf32, #tpu.memory_space<vmem>>, vector<2x1024xf32>
    %cst = arith.constant 3.000000e+00 : f32
    %1 = vector.broadcast %cst : f32 to vector<2x1024xf32>
    %2 = arith.addf %0, %1 : vector<2x1024xf32>
    %cst_1 = arith.constant 0.000000e+00 : f32
    %cst_2 = arith.constant 6.000000e+00 : f32
    %3 = vector.broadcast %cst_1 : f32 to vector<2x1024xf32>
    %4 = arith.maximumf %3, %2 : vector<2x1024xf32>
    %5 = vector.broadcast %cst_2 : f32 to vector<2x1024xf32>
    %6 = arith.minimumf %5, %4 : vector<2x1024xf32>
    %cst_3 = arith.constant 0.166666672 : f32
    %7 = vector.broadcast %cst_3 : f32 to vector<2x1024xf32>
    %8 = arith.mulf %6, %7 : vector<2x1024xf32>
    %c0_4 = arith.constant 0 : index
    %c0_5 = arith.constant 0 : index
    %9 = vector.load %arg2[%c0_4, %c0_5] : memref<2x1024xf32, #tpu.memory_space<vmem>>, vector<2x1024xf32>
    tpu.vector_store %arg2[%c0_4, %c0_5], %8 {strides = array<i32>} : memref<2x1024xf32, #tpu.memory_space<vmem>>, vector<2x1024xf32>,
    return
  }
  func.func @transform_0(%arg0: i32) -> (i32, i32) {
    %c0_i32 = arith.constant 0 : i32
    %c0_i32_0 = arith.constant 0 : i32
    return %arg0, %c0_i32 : i32, i32
  }
  func.func @transform_1(%arg0: i32) -> (i32, i32) {
    %c0_i32 = arith.constant 0 : i32
    %c0_i32_0 = arith.constant 0 : i32
    return %arg0, %c0_i32 : i32, i32
  }
}

</mosaic_0001>

<llo_original>
// kernel: tpu_custom_call.1
$region0: #{tpu_custom_call.1}
  #allocation0 [shape = 'u32[]', space=smem, size = 0x4, offset = 0x4, fixed_abs, tag = 'smem constant byte address 0x4 - core index']
  #allocation1 [shape = 'u32[144,128]{1,0:T(1,128)}', space=vmem, size = 0x12000, scoped, tag = 'internal scratch']
  %s0 = inlined_call_operand.hbm [shape: f32[2,1024], index: 0, kind: input, shape index: {}]
  %s1 = inlined_call_operand.hbm [shape: f32[2,1024], index: 1, kind: output, shape index: {}]
  %s2 = sld [smem:[#allocation0]]
  $region18: #{tpu_custom_call.1} parent=0
    _
  %s4 = ssub.s32 1, %s2
  %s5 = scalar_select 0, %s4, %s2
  $region1: #{tpu_custom_call.1} parent=0
    #allocation2 [shape = 'u8[8192]{0}', space=vmem, size = 0x2000, scoped, tag = 'input window, operand 0, single buffered']
    #allocation3 [shape = 's32[1]{0}', space=sflag, size = 0x4, scoped, tag = 'scoped memory for tpu_custom_call.1']
    #allocation4 [shape = 's32[1]{0}', space=sflag, size = 0x4, scoped, tag = 'scoped memory for tpu_custom_call.1']
    #allocation5 [shape = 'u8[8192]{0}', space=vmem, size = 0x2000, scoped, tag = 'output window, operand 0, single buffered']
    %6 = vsyncpa [#allocation3], 0
    %7 = vsyncpa [#allocation4], 0
    // Predicated region
    $region2: #{tpu_custom_call.1} parent=1 // pred_check
      _
    $region3: #{tpu_custom_call.1} parent=1 // pred_check_branch
      %9 = sbr.rel (0) target = $region5
    $region4: #{tpu_custom_call.1} parent=1 // pred_region
      %s11 = ssub.s32 256, 256
      %12 = vsyncadd [#allocation3], %s11
      %s14 = sshll.u32 [#allocation2], 4
      %s15 = int_to_ptr.vmem [resolvable:$true] %s14
      %17 = dma.hbm_to_vmem [thread:$0]  %s0, 256, %s15, [#allocation3]
    $region5: #{tpu_custom_call.1} parent=1 // pred_fallthru
      _
    // Predicated region
    $region6: #{tpu_custom_call.1} parent=1 // pred_check
      _
    $region7: #{tpu_custom_call.1} parent=1 // pred_check_branch
      %19 = sbr.rel (0) target = $region9
    $region8: #{tpu_custom_call.1} parent=1 // pred_region
      %20 = dma.done [#allocation3], 256
    $region9: #{tpu_custom_call.1} parent=1 // pred_fallthru
      _
    %v21 = vld [vmem:[#allocation2] sm:$0xff]
    %v22 = vld [vmem:[#allocation2 + $0x8] sm:$0xff]
    %v23 = vadd.f32 %v21, 3.0
    %v24 = vadd.f32 %v22, 3.0
    %v25 = vmax.f32 %v23, 0.0
    %v26 = vmax.f32 %v24, 0.0
    %v27 = vmin.f32 %v25, 6.0
    %v28 = vmin.f32 %v26, 6.0
    %v29 = vmul.f32 %v27, 0.16666667
    %v30 = vmul.f32 %v28, 0.16666667
    %31 = vst [vmem:[#allocation5] sm:$0xff] %v29
    %32 = vst [vmem:[#allocation5 + $0x8] sm:$0xff] %v30
    // Predicated region
    $region10: #{tpu_custom_call.1} parent=1 // pred_check
      _
    $region11: #{tpu_custom_call.1} parent=1 // pred_check_branch
      %34 = sbr.rel (0) target = $region13
    $region12: #{tpu_custom_call.1} parent=1 // pred_region
      %s36 = ssub.s32 256, 256
      %37 = vsyncadd [#allocation4], %s36
      %s39 = sshll.u32 [#allocation5], 4
      %s40 = int_to_ptr.vmem [resolvable:$true] %s39
      %42 = dma.vmem_to_hbm [thread:$0]  %s40, 256, %s1, [#allocation4]
    $region13: #{tpu_custom_call.1} parent=1 // pred_fallthru
      _
    // Predicated region
    $region14: #{tpu_custom_call.1} parent=1 // pred_check
      _
    $region15: #{tpu_custom_call.1} parent=1 // pred_check_branch
      %44 = sbr.rel (0) target = $region17
    $region16: #{tpu_custom_call.1} parent=1 // pred_region
      %45 = dma.done [#allocation4], 256
    $region17: #{tpu_custom_call.1} parent=1 // pred_fallthru
      _
    %46 = vsyncpa [#allocation3], 1
    %47 = vsyncpa [#allocation4], 1

</llo_original>
